<compile_context>
chip_gen: v7x
topology: tpu7x:2x2x1
jax: 0.10.0
libtpu: 0.0.40
codegen_flags: <defaults>
</compile_context>

<pallas_src>
import functools
import math

import jax
import jax.numpy as jnp
from jax.experimental import pallas as pl
from jax.experimental.pallas import tpu as pltpu


# ---------------------------------------------------------------------------
# Kernels
# ---------------------------------------------------------------------------
def _matmul_kernel(x_ref, w_ref, o_ref):
    # Whole-K: one MXU matmul per (tm, Nw) output tile, f32 accumulation.
    o_ref[...] = jnp.dot(
        x_ref[...], w_ref[...], preferred_element_type=jnp.float32
    ).astype(o_ref.dtype)


def _matmul_acc_kernel(x_ref, w_ref, o_ref, acc_ref, *, tk):
    # K-tiled: f32 VMEM accumulator, init at k==0, store at k==last.
    # The FULL widened weight is VMEM-resident (constant block index) and
    # sliced here with pl.ds, so it is fetched from HBM exactly once.
    k = pl.program_id(1)

    @pl.when(k == 0)
    def _():
        acc_ref[...] = jnp.zeros_like(acc_ref)

    off = pl.multiple_of(k * tk, tk)
    acc_ref[...] += jnp.dot(
        x_ref[...], w_ref[pl.ds(off, tk), :], preferred_element_type=jnp.float32
    )

    @pl.when(k == pl.num_programs(1) - 1)
    def _():
        o_ref[...] = acc_ref[...].astype(o_ref.dtype)


def _fused_unembed_kernel(x_ref, w_ref, o_ref, *, rows, wp, c, p):
    # Fused matmul + NCHW patch scatter.
    #   x_ref: (1, rows*wp, E)  tokens of `rows` patch-rows
    #   w_ref: (E, C*p*p)       resident weight
    #   o_ref: (1, C, rows*p, wp*p)  block of the (B, C, H, W) output
    y = jnp.dot(x_ref[0], w_ref[...], preferred_element_type=jnp.float32)
    y = y.reshape(rows, wp, c, p, p)
    y = jnp.transpose(y, (2, 0, 3, 1, 4))            # (C, rows, p, wp, p)
    o_ref[0] = y.reshape(c, rows * p, wp * p).astype(o_ref.dtype)


# ---------------------------------------------------------------------------
# Tiling helpers
# ---------------------------------------------------------------------------
def _vmem_capacity_bytes():
    try:
        return int(pltpu.get_tpu_info().vmem_capacity_bytes)
    except Exception:
        return 64 * 1024 * 1024  # conservative (v7x-sized) fallback


def _pick_tm(mg, xk, nw, kd, in_b, out_b, budget, *, acc):
    """Largest sublane-aligned token tile that keeps double-buffered x/out
    tiles + the resident weight (+ f32 accumulator) under the VMEM budget."""
    fixed = 2 * kd * nw * in_b                         # weight (double-buffered)
    per_row = 2 * xk * in_b + 2 * nw * out_b + (4 * nw if acc else 0)
    tm = (budget - fixed) // per_row
    tm = int(max(8, min(tm, 8192, mg)))
    if tm < mg:
        tm = max((tm // 8) * 8, 8)
    if mg >= 16:
        # Keep at least two M tiles so the "parallel" axis can shard across
        # both TensorCores (megacore / v7x).
        half = max(8, ((mg // 2) // 8) * 8)
        tm = min(tm, half)
    return tm


# ---------------------------------------------------------------------------
# Unfused matmul path ((M, E) @ (E, N) on the MXU, lane-dense widened)
# ---------------------------------------------------------------------------
def _unembed_matmul(x2, w_flat, *, out_dtype, tm=None, tk=None, interpret=False):
    M, E = x2.shape
    _, N = w_flat.shape
    in_dtype = x2.dtype
    in_b = jnp.dtype(in_dtype).itemsize
    out_b = jnp.dtype(out_dtype).itemsize

    # Lane widening: pack G consecutive tokens per row (free row-major reshape)
    # with a block-diagonal weight so loads/stores hit full 128/256 lanes.
    G = 1
    for cand in (4, 2):
        gn = cand * N
        if gn <= 256 and gn % 128 == 0 and M % cand == 0:
            G = cand
            break
    # TODO(synk): when N does not divide 128 (e.g. C=3 -> N=48), zero-pad the
    # weight columns to the next 128 multiple instead of masked stores.
    Kd, Nw, Mg = G * E, G * N, M // G

    xw = x2.reshape(Mg, Kd)                            # free row-major regroup
    wq = w_flat.astype(in_dtype)                       # tiny; stream dtype = x dtype
    if G == 1:
        wb = wq
    else:
        wb = jnp.einsum("gh,en->gehn", jnp.eye(G, dtype=in_dtype), wq)
        wb = wb.reshape(Kd, Nw)

    cap = _vmem_capacity_bytes()
    budget = cap // 2

    # Whole-K unless even a ~256-row x tile would not fit the budget.
    if tk is None:
        tm_whole = _pick_tm(Mg, Kd, Nw, Kd, in_b, out_b, budget, acc=False)
        if tm_whole >= min(256, Mg) or Kd % 128 != 0:
            tk = Kd
        else:
            tk = 512 if Kd % 512 == 0 else 128
    assert Kd % tk == 0, "K tile must evenly divide the (widened) embed dim"
    nk = Kd // tk

    if tm is None:
        tm = _pick_tm(Mg, tk, Nw, Kd, in_b, out_b, budget, acc=(nk > 1))
    gm = pl.cdiv(Mg, tm)

    # Explicit scoped-VMEM limit (v5e default is only 16 MiB).
    foot = (2 * tm * tk * in_b + 2 * tm * Nw * out_b + 2 * Kd * Nw * in_b
            + (tm * Nw * 4 if nk > 1 else 0))
    vmem_limit = int(min(cap * 3 // 4, max(foot + (4 << 20), 32 << 20)))

    cost = pl.CostEstimate(
        flops=2 * Mg * Kd * Nw,
        transcendentals=0,
        bytes_accessed=Mg * Kd * in_b + Kd * Nw * in_b + Mg * Nw * out_b,
    )

    if nk == 1:
        y = pl.pallas_call(
            _matmul_kernel,
            out_shape=jax.ShapeDtypeStruct((Mg, Nw), out_dtype),
            grid=(gm,),
            in_specs=[
                pl.BlockSpec((tm, Kd), lambda i: (i, 0)),
                pl.BlockSpec((Kd, Nw), lambda i: (0, 0)),   # VMEM-resident weight
            ],
            out_specs=pl.BlockSpec((tm, Nw), lambda i: (i, 0)),
            compiler_params=pltpu.CompilerParams(
                dimension_semantics=("parallel",),
                vmem_limit_bytes=vmem_limit),
            cost_estimate=cost,
            interpret=interpret,
        )(xw, wb)
    else:
        y = pl.pallas_call(
            functools.partial(_matmul_acc_kernel, tk=tk),
            out_shape=jax.ShapeDtypeStruct((Mg, Nw), out_dtype),
            grid=(gm, nk),
            in_specs=[
                pl.BlockSpec((tm, tk), lambda i, k: (i, k)),
                # Full weight stays resident; sliced with pl.ds inside the kernel.
                pl.BlockSpec((Kd, Nw), lambda i, k: (0, 0)),
            ],
            out_specs=pl.BlockSpec((tm, Nw), lambda i, k: (i, 0)),
            scratch_shapes=[pltpu.VMEM((tm, Nw), jnp.float32)],
            compiler_params=pltpu.CompilerParams(
                dimension_semantics=("parallel", "arbitrary"),
                vmem_limit_bytes=vmem_limit),
            cost_estimate=cost,
            interpret=interpret,
        )(xw, wb)

    return y.reshape(M, N)


# ---------------------------------------------------------------------------
# Fused matmul + scatter path (writes (B, C, H, W) blocks directly)
# ---------------------------------------------------------------------------
def _unembed_fused(x, w_flat, *, B, Hp, Wp, C, p, out_dtype, interpret=False):
    H, W = Hp * p, Wp * p
    E = x.shape[-1]
    in_dtype = x.dtype
    in_b = jnp.dtype(in_dtype).itemsize
    N = C * p * p
    wq = w_flat.astype(in_dtype)

    # Patch-rows per grid step: output block height rows*p must be a sublane
    # multiple (or the full H); grow rows to amortize the fixed per-step cost.
    r0 = 8 // math.gcd(p, 8)
    if Hp % r0 != 0:
        rows = Hp
    else:
        rows = r0
        x_row_bytes = Wp * E * in_b
        while Hp % (rows * 2) == 0 and rows * 2 * x_row_bytes <= (2 << 20):
            rows *= 2
    gh = Hp // rows
    T = rows * Wp

    cap = _vmem_capacity_bytes()
    foot = 2 * (T * E * in_b + C * rows * p * W * jnp.dtype(out_dtype).itemsize
                + E * N * in_b) + T * N * 4
    vmem_limit = int(min(cap * 3 // 4, max(foot + (4 << 20), 32 << 20)))

    kern = functools.partial(_fused_unembed_kernel, rows=rows, wp=Wp, c=C, p=p)
    return pl.pallas_call(
        kern,
        out_shape=jax.ShapeDtypeStruct((B, C, H, W), out_dtype),
        grid=(B, gh),
        in_specs=[
            pl.BlockSpec((1, T, E), lambda b, h: (b, h, 0)),
            pl.BlockSpec((E, N), lambda b, h: (0, 0)),
        ],
        out_specs=pl.BlockSpec((1, C, rows * p, W), lambda b, h: (b, 0, h, 0)),
        compiler_params=pltpu.CompilerParams(
            dimension_semantics=("parallel", "parallel"),
            vmem_limit_bytes=vmem_limit),
        interpret=interpret,
    )(x, wq)


# ---------------------------------------------------------------------------
# Module forward
# ---------------------------------------------------------------------------
def patch_unembedding_forward(x, conv_weight, size, patch_size, out_channels,
                              *, use_pallas=None, fuse_scatter=False,
                              tm=None, tk=None, interpret=False):
    """x: (B, L, E); conv_weight: (E, C, p, p) [ConvTranspose2d layout].
    Returns (B, C, H, W), matching the PyTorch module's forward()."""
    H, W = size
    p, C = patch_size, out_channels
    B, L, E = x.shape
    Hp, Wp = H // p, W // p
    assert L == Hp * Wp, "token count must match (H/p)*(W/p)"

    N = C * p * p
    M = B * L
    out_dtype = x.dtype
    w_flat = conv_weight.reshape(E, N)

    if fuse_scatter:
        # Scatter fused into the kernel's out_specs: no post-hoc XLA transpose,
        # saving one full HBM read+write of the output.
        return _unembed_fused(x, w_flat, B=B, Hp=Hp, Wp=Wp, C=C, p=p,
                              out_dtype=out_dtype, interpret=interpret)

    if use_pallas is None:
        # Tiny problems: launch + per-step grid overhead dwarfs the matmul.
        use_pallas = (M * E * N) >= (1 << 22)

    if use_pallas:
        y = _unembed_matmul(x.reshape(M, E), w_flat, out_dtype=out_dtype,
                            tm=tm, tk=tk, interpret=interpret)
    else:
        y = jnp.dot(x.reshape(M, E), w_flat.astype(x.dtype),
                    preferred_element_type=jnp.float32).astype(out_dtype)

    # Pure-layout scatter of each token's (C, p, p) patch into the NCHW image.
    # TODO(synk): make fuse_scatter the default once the in-kernel relayout
    # (reshape + 5-D transpose) is validated by Mosaic on real hardware; this
    # XLA transpose costs one extra HBM read+write of the output.
    y = y.reshape(B, Hp, Wp, C, p, p)
    y = jnp.transpose(y, (0, 3, 1, 4, 2, 5))          # (B, C, Hp, p, Wp, p)
    return y.reshape(B, C, H, W)


# ---------------------------------------------------------------------------
# Self-test
# ---------------------------------------------------------------------------
if __name__ == "__main__":
    def reference(xx, ww, HH, WW, p, C):
        b = xx.shape[0]
        Hp, Wp = HH // p, WW // p
        r = jnp.einsum("ble,ecij->blcij",
                       xx.astype(jnp.float32), ww.astype(jnp.float32))
        r = r.reshape(b, Hp, Wp, C, p, p)
        return jnp.transpose(r, (0, 3, 1, 4, 2, 5)).reshape(b, C, HH, WW)

    key = jax.random.PRNGKey(0)
    k1, k2, k3, k4, k5, k6 = jax.random.split(key, 6)

    # --- 1) default module config, f32, whole-K kernel ----------------------
    C1, p1, E1 = 4, 4, 64                   # embed_dim default = p*p*C = 64
    B1, H1, W1 = 2, 16, 16
    L1 = (H1 // p1) * (W1 // p1)
    x1 = jax.random.normal(k1, (B1, L1, E1), jnp.float32)
    w1 = jax.random.normal(k2, (E1, C1, p1, p1), jnp.float32) * 0.02

    out1 = patch_unembedding_forward(x1, w1, (H1, W1), p1, C1, use_pallas=True)
    out1 = jax.block_until_ready(out1)
    ref1 = reference(x1, w1, H1, W1, p1, C1)
    assert out1.shape == (B1, C1, H1, W1)
    assert jnp.allclose(out1, ref1, atol=1e-4, rtol=1e-4)

    # --- 2) bf16 input (kernel streams bf16, accumulates f32) ---------------
    x1b = x1.astype(jnp.bfloat16)
    out2 = patch_unembedding_forward(x1b, w1, (H1, W1), p1, C1, use_pallas=True)
    out2 = jax.block_until_ready(out2)
    ref2 = reference(x1b.astype(jnp.float32), w1, H1, W1, p1, C1)
    assert jnp.allclose(out2.astype(jnp.float32), ref2, atol=2e-2, rtol=2e-2)

    # --- 3) larger embed dim, forced small tiles -> K-tiled accumulator -----
    C3, p3, E3 = 4, 4, 256
    B3, H3, W3 = 2, 32, 32
    L3 = (H3 // p3) * (W3 // p3)
    x3 = jax.random.normal(k3, (B3, L3, E3), jnp.float32)
    w3 = jax.random.normal(k4, (E3, C3, p3, p3), jnp.float32) * 0.02
    out3 = patch_unembedding_forward(x3, w3, (H3, W3), p3, C3,
                                     use_pallas=True, tm=32, tk=128)
    out3 = jax.block_until_ready(out3)
    ref3 = reference(x3, w3, H3, W3, p3, C3)
    assert jnp.allclose(out3, ref3, atol=2e-3, rtol=2e-3)

    # --- 4) fused matmul + NCHW scatter (experimental) ----------------------
    # Try the real TPU lowering first; if Mosaic rejects the in-kernel relayout
    # fall back to interpret mode so the rearrangement semantics are still
    # verified against the reference.
    C4, p4, E4 = 4, 4, 64
    B4, H4, W4 = 1, 8, 128
    L4 = (H4 // p4) * (W4 // p4)
    x4 = jax.random.normal(k5, (B4, L4, E4), jnp.float32)
    w4 = jax.random.normal(k6, (E4, C4, p4, p4), jnp.float32) * 0.02
    ref4 = reference(x4, w4, H4, W4, p4, C4)
    try:
        out4 = patch_unembedding_forward(x4, w4, (H4, W4), p4, C4,
                                         fuse_scatter=True)
        out4 = jax.block_until_ready(out4)
        assert jnp.allclose(out4, ref4, atol=1e-4, rtol=1e-4)
    except Exception:
        out4 = patch_unembedding_forward(x4, w4, (H4, W4), p4, C4,
                                         fuse_scatter=True, interpret=True)
        out4 = jax.block_until_ready(out4)
        assert jnp.allclose(out4, ref4, atol=1e-4, rtol=1e-4)

    print("KERNEL_OK")
</pallas_src>

<mosaic_0001>
module attributes {stable_mosaic.version = 11 : i64} {
  func.func @_matmul_kernel(%arg0: i32, %arg1: memref<8x256xf32, #tpu.memory_space<vmem>>, %arg2: memref<256x256xf32, #tpu.memory_space<vmem>>, %arg3: memref<8x256xf32, #tpu.memory_space<vmem>>) attributes {dimension_semantics = [#tpu.dimension_semantics<parallel>], iteration_bounds = array<i64: 1>, scalar_prefetch = 0 : i64, scratch_operands = 0 : i64, tpu.core_type = #tpu.core_type<tc>, window_params = [{transform_indices = @transform_0, window_bounds = array<i64: 8, 256>}, {pipeline_mode = #tpu.pipeline_mode<synchronous>, transform_indices = @transform_1, window_bounds = array<i64: 256, 256>}, {transform_indices = @transform_2, window_bounds = array<i64: 8, 256>}]} {
    %c0 = arith.constant 0 : index
    %c0_0 = arith.constant 0 : index
    %0 = vector.load %arg1[%c0, %c0_0] : memref<8x256xf32, #tpu.memory_space<vmem>>, vector<8x256xf32>
    %c0_1 = arith.constant 0 : index
    %c0_2 = arith.constant 0 : index
    %1 = vector.load %arg2[%c0_1, %c0_2] : memref<256x256xf32, #tpu.memory_space<vmem>>, vector<256x256xf32>
    %cst = arith.constant dense<0.000000e+00> : vector<8x256xf32>
    %2 = tpu.matmul %0, %1, %cst {dimension_numbers = #tpu.dot_dimension_numbers<[1], [0], [0], [1], [0, 0, 1, 1], [], []>} : vector<8x256xf32>, vector<256x256xf32>, vector<8x256xf32> -> vector<8x256xf32>
    %c0_3 = arith.constant 0 : index
    %c0_4 = arith.constant 0 : index
    %3 = vector.load %arg3[%c0_3, %c0_4] : memref<8x256xf32, #tpu.memory_space<vmem>>, vector<8x256xf32>
    tpu.vector_store %arg3[%c0_3, %c0_4], %2 {strides = array<i32>} : memref<8x256xf32, #tpu.memory_space<vmem>>, vector<8x256xf32>,
    return
  }
  func.func @transform_0(%arg0: i32) -> (i32, i32) {
    %c0_i32 = arith.constant 0 : i32
    %c0_i32_0 = arith.constant 0 : i32
    return %arg0, %c0_i32 : i32, i32
  }
  func.func @transform_1(%arg0: i32) -> (i32, i32) {
    %c0_i32 = arith.constant 0 : i32
    %c0_i32_0 = arith.constant 0 : i32
    %c0_i32_1 = arith.constant 0 : i32
    return %c0_i32, %c0_i32_0 : i32, i32
  }
  func.func @transform_2(%arg0: i32) -> (i32, i32) {
    %c0_i32 = arith.constant 0 : i32
    %c0_i32_0 = arith.constant 0 : i32
    return %arg0, %c0_i32 : i32, i32
  }
}

</mosaic_0001>

<llo_original>
// kernel: tpu_custom_call.1
$region0: #{tpu_custom_call.1}
  #allocation0 [shape = 'u32[]', space=smem, size = 0x4, offset = 0x4, fixed_abs, tag = 'smem constant byte address 0x4 - core index']
  #allocation1 [shape = 'u32[144,128]{1,0:T(1,128)}', space=vmem, size = 0x12000, scoped, tag = 'internal scratch']
  %s0 = inlined_call_operand.hbm [shape: f32[8,256], index: 0, kind: input, shape index: {}]
  %s1 = inlined_call_operand.hbm [shape: f32[256,256], index: 1, kind: input, shape index: {}]
  %s2 = inlined_call_operand.hbm [shape: f32[8,256], index: 2, kind: output, shape index: {}]
  %s3 = sld [smem:[#allocation0]]
  $region26: #{tpu_custom_call.1} parent=0
    _
  %s5 = ssub.s32 1, %s3
  %s6 = scalar_select 0, %s5, %s3
  $region1: #{tpu_custom_call.1} parent=0
    #allocation2 [shape = 'u8[8192]{0}', space=vmem, size = 0x2000, scoped, tag = 'input window, operand 0, single buffered']
    #allocation3 [shape = 's32[1]{0}', space=sflag, size = 0x4, scoped, tag = 'scoped memory for tpu_custom_call.1']
    #allocation4 [shape = 's32[1]{0}', space=sflag, size = 0x4, scoped, tag = 'scoped memory for tpu_custom_call.1']
    #allocation5 [shape = 'u8[262144]{0}', space=vmem, size = 0x40000, scoped, tag = 'input window, operand 1, single buffered']
    #allocation6 [shape = 's32[1]{0}', space=sflag, size = 0x4, scoped, tag = 'scoped memory for tpu_custom_call.1']
    #allocation7 [shape = 'u8[8192]{0}', space=vmem, size = 0x2000, scoped, tag = 'output window, operand 0, single buffered']
    %7 = vsyncpa [#allocation3], 0
    %8 = vsyncpa [#allocation6], 0
    %9 = vsyncpa [#allocation4], 0
    // Predicated region
    $region2: #{tpu_custom_call.1} parent=1 // pred_check
      _
    $region3: #{tpu_custom_call.1} parent=1 // pred_check_branch
      %11 = sbr.rel (0) target = $region5
    $region4: #{tpu_custom_call.1} parent=1 // pred_region
      %s13 = ssub.s32 256, 256
      %14 = vsyncadd [#allocation3], %s13
      %s16 = sshll.u32 [#allocation2], 4
      %s17 = int_to_ptr.vmem [resolvable:$true] %s16
      %19 = dma.hbm_to_vmem [thread:$0]  %s0, 256, %s17, [#allocation3]
    $region5: #{tpu_custom_call.1} parent=1 // pred_fallthru
      _
    // Predicated region
    $region6: #{tpu_custom_call.1} parent=1 // pred_check
      _
    $region7: #{tpu_custom_call.1} parent=1 // pred_check_branch
      %21 = sbr.rel (0) target = $region9
    $region8: #{tpu_custom_call.1} parent=1 // pred_region
      %s23 = ssub.s32 8192, 8192
      %24 = vsyncadd [#allocation6], %s23
      %s25 = sshll.u32 [#allocation5], 4
      %s26 = int_to_ptr.vmem [resolvable:$true] %s25
      %31 = dma.hbm_to_vmem [thread:$0]  %s1, 8192, %s26, [#allocation6], 256, 256, 16
    $region9: #{tpu_custom_call.1} parent=1 // pred_fallthru
      _
    // Predicated region
    $region10: #{tpu_custom_call.1} parent=1 // pred_check
      _
    $region11: #{tpu_custom_call.1} parent=1 // pred_check_branch
      %33 = sbr.rel (0) target = $region13
    $region12: #{tpu_custom_call.1} parent=1 // pred_region
      %34 = dma.done [#allocation3], 256
    $region13: #{tpu_custom_call.1} parent=1 // pred_fallthru
      _
    // Predicated region
    $region14: #{tpu_custom_call.1} parent=1 // pred_check
      _
    $region15: #{tpu_custom_call.1} parent=1 // pred_check_branch
      %36 = sbr.rel (0) target = $region17
    $region16: #{tpu_custom_call.1} parent=1 // pred_region
      %37 = dma.done [#allocation6], 8192
    $region17: #{tpu_custom_call.1} parent=1 // pred_fallthru
      _
    %v38 = vld [vmem:[#allocation2] sm:$0xff]
    %v39 = vld [vmem:[#allocation2 + $0x8] sm:$0xff]
    %v40 = vld [vmem:[#allocation5] sm:$0xff]
    %v41 = vld [vmem:[#allocation5 + $0x8] sm:$0xff]
    %v42 = vld [vmem:[#allocation5 + $0x10] sm:$0xff]
    %v43 = vld [vmem:[#allocation5 + $0x18] sm:$0xff]
    %v44 = vld [vmem:[#allocation5 + $0x20] sm:$0xff]
    %v45 = vld [vmem:[#allocation5 + $0x28] sm:$0xff]
    %v46 = vld [vmem:[#allocation5 + $0x30] sm:$0xff]
    %v47 = vld [vmem:[#allocation5 + $0x38] sm:$0xff]
    %v48 = vld [vmem:[#allocation5 + $0x40] sm:$0xff]
    %v49 = vld [vmem:[#allocation5 + $0x48] sm:$0xff]
    %v50 = vld [vmem:[#allocation5 + $0x50] sm:$0xff]
    %v51 = vld [vmem:[#allocation5 + $0x58] sm:$0xff]
    %v52 = vld [vmem:[#allocation5 + $0x60] sm:$0xff]
    %v53 = vld [vmem:[#allocation5 + $0x68] sm:$0xff]
    %v54 = vld [vmem:[#allocation5 + $0x70] sm:$0xff]
    %v55 = vld [vmem:[#allocation5 + $0x78] sm:$0xff]
    %v56 = vld [vmem:[#allocation5 + $0x80] sm:$0xff]
    %v57 = vld [vmem:[#allocation5 + $0x88] sm:$0xff]
    %v58 = vld [vmem:[#allocation5 + $0x90] sm:$0xff]
    %v59 = vld [vmem:[#allocation5 + $0x98] sm:$0xff]
    %v60 = vld [vmem:[#allocation5 + $0xa0] sm:$0xff]
    %v61 = vld [vmem:[#allocation5 + $0xa8] sm:$0xff]
    %v62 = vld [vmem:[#allocation5 + $0xb0] sm:$0xff]
    %v63 = vld [vmem:[#allocation5 + $0xb8] sm:$0xff]
    %v64 = vld [vmem:[#allocation5 + $0xc0] sm:$0xff]
    %v65 = vld [vmem:[#allocation5 + $0xc8] sm:$0xff]
    %v66 = vld [vmem:[#allocation5 + $0xd0] sm:$0xff]
    %v67 = vld [vmem:[#allocation5 + $0xd8] sm:$0xff]
    %v68 = vld [vmem:[#allocation5 + $0xe0] sm:$0xff]
    %v69 = vld [vmem:[#allocation5 + $0xe8] sm:$0xff]
    %v70 = vld [vmem:[#allocation5 + $0xf0] sm:$0xff]
    %v71 = vld [vmem:[#allocation5 + $0xf8] sm:$0xff]
    %v72 = vld [vmem:[#allocation5 + $0x100] sm:$0xff]
    %v73 = vld [vmem:[#allocation5 + $0x108] sm:$0xff]
    %v74 = vld [vmem:[#allocation5 + $0x110] sm:$0xff]
    %v75 = vld [vmem:[#allocation5 + $0x118] sm:$0xff]
    %v76 = vld [vmem:[#allocation5 + $0x120] sm:$0xff]
    %v77 = vld [vmem:[#allocation5 + $0x128] sm:$0xff]
    %v78 = vld [vmem:[#allocation5 + $0x130] sm:$0xff]
    %v79 = vld [vmem:[#allocation5 + $0x138] sm:$0xff]
    %v80 = vld [vmem:[#allocation5 + $0x140] sm:$0xff]
    %v81 = vld [vmem:[#allocation5 + $0x148] sm:$0xff]
    %v82 = vld [vmem:[#allocation5 + $0x150] sm:$0xff]
    %v83 = vld [vmem:[#allocation5 + $0x158] sm:$0xff]
    %v84 = vld [vmem:[#allocation5 + $0x160] sm:$0xff]
    %v85 = vld [vmem:[#allocation5 + $0x168] sm:$0xff]
    %v86 = vld [vmem:[#allocation5 + $0x170] sm:$0xff]
    %v87 = vld [vmem:[#allocation5 + $0x178] sm:$0xff]
    %v88 = vld [vmem:[#allocation5 + $0x180] sm:$0xff]
    %v89 = vld [vmem:[#allocation5 + $0x188] sm:$0xff]
    %v90 = vld [vmem:[#allocation5 + $0x190] sm:$0xff]
    %v91 = vld [vmem:[#allocation5 + $0x198] sm:$0xff]
    %v92 = vld [vmem:[#allocation5 + $0x1a0] sm:$0xff]
    %v93 = vld [vmem:[#allocation5 + $0x1a8] sm:$0xff]
    %v94 = vld [vmem:[#allocation5 + $0x1b0] sm:$0xff]
    %v95 = vld [vmem:[#allocation5 + $0x1b8] sm:$0xff]
    %v96 = vld [vmem:[#allocation5 + $0x1c0] sm:$0xff]
    %v97 = vld [vmem:[#allocation5 + $0x1c8] sm:$0xff]
    %v98 = vld [vmem:[#allocation5 + $0x1d0] sm:$0xff]
    %v99 = vld [vmem:[#allocation5 + $0x1d8] sm:$0xff]
    %v100 = vld [vmem:[#allocation5 + $0x1e0] sm:$0xff]
    %v101 = vld [vmem:[#allocation5 + $0x1e8] sm:$0xff]
    %v102 = vld [vmem:[#allocation5 + $0x1f0] sm:$0xff]
    %v103 = vld [vmem:[#allocation5 + $0x1f8] sm:$0xff]
    %104 = vmatprep.subr.mxu0 %v41
    %105 = vmatpush1.msra.mxu0 %v40
    %106 = vmatprep.subr.mxu0 %v43
    %107 = vmatpush1.msra.mxu0 %v42
    %108 = vmatprep.subr.mxu0 %v45
    %109 = vmatpush1.msra.mxu0 %v44
    %110 = vmatprep.subr.mxu0 %v47
    %111 = vmatpush1.msra.mxu0 %v46
    %112 = vmatprep.subr.mxu0 %v49
    %113 = vmatpush1.msra.mxu0 %v48
    %114 = vmatprep.subr.mxu0 %v51
    %115 = vmatpush1.msra.mxu0 %v50
    %116 = vmatprep.subr.mxu0 %v53
    %117 = vmatpush1.msra.mxu0 %v52
    %118 = vmatprep.subr.mxu0 %v55
    %119 = vmatpush1.msra.mxu0 %v54
    %120 = vmatprep.subr.mxu0 %v57
    %121 = vmatpush1.msra.mxu0 %v56
    %122 = vmatprep.subr.mxu0 %v59
    %123 = vmatpush1.msra.mxu0 %v58
    %124 = vmatprep.subr.mxu0 %v61
    %125 = vmatpush1.msra.mxu0 %v60
    %126 = vmatprep.subr.mxu0 %v63
    %127 = vmatpush1.msra.mxu0 %v62
    %128 = vmatprep.subr.mxu0 %v65
    %129 = vmatpush1.msra.mxu0 %v64
    %130 = vmatprep.subr.mxu0 %v67
    %131 = vmatpush1.msra.mxu0 %v66
    %132 = vmatprep.subr.mxu0 %v69
    %133 = vmatpush1.msra.mxu0 %v68
    %134 = vmatprep.subr.mxu0 %v71
    %135 = vmatpush1.msra.mxu0 %v70
    %136 = vmatprep.subr.mxu0 %v73
    %137 = vmatpush1.msra.mxu0 %v72
    %138 = vmatprep.subr.mxu0 %v75
    %139 = vmatpush1.msra.mxu0 %v74
    %140 = vmatprep.subr.mxu0 %v77
    %141 = vmatpush1.msra.mxu0 %v76
    %142 = vmatprep.subr.mxu0 %v79
    %143 = vmatpush1.msra.mxu0 %v78
    %144 = vmatprep.subr.mxu0 %v81
    %145 = vmatpush1.msra.mxu0 %v80
    %146 = vmatprep.subr.mxu0 %v83
    %147 = vmatpush1.msra.mxu0 %v82
    %148 = vmatprep.subr.mxu0 %v85
    %149 = vmatpush1.msra.mxu0 %v84
    %150 = vmatprep.subr.mxu0 %v87
    %151 = vmatpush1.msra.mxu0 %v86
    %152 = vmatprep.subr.mxu0 %v89
    %153 = vmatpush1.msra.mxu0 %v88
    %154 = vmatprep.subr.mxu0 %v91
    %155 = vmatpush1.msra.mxu0 %v90
    %156 = vmatprep.subr.mxu0 %v93
    %157 = vmatpush1.msra.mxu0 %v92
    %158 = vmatprep.subr.mxu0 %v95
    %159 = vmatpush1.msra.mxu0 %v94
    %160 = vmatprep.subr.mxu0 %v97
    %161 = vmatpush1.msra.mxu0 %v96
    %162 = vmatprep.subr.mxu0 %v99
    %163 = vmatpush1.msra.mxu0 %v98
    %164 = vmatprep.subr.mxu0 %v101
    %165 = vmatpush1.msra.mxu0 %v100
    %166 = vmatprep.subr.mxu0 %v103
    %167 = vmatpush1.msra.mxu0 %v102
    %168 = vmatprep.mubr.f32.mxu0 %v39
    %169 = vmatmul.mubr.f32.gmra.mrb[0].mxu0 %v38
    %v170 = vpop.f32.mrb[0].mxu0
    %v171 = vadd.f32 0.0, %v170
    %v172 = vpop.f32.mrb[0].mxu0
    %v173 = vadd.f32 0.0, %v172
    %174 = vdwg.mxu0
    %175 = vst [vmem:[#allocation7] sm:$0xff] %v171
    %176 = vst [vmem:[#allocation7 + $0x8] sm:$0xff] %v173
    // Predicated region
    $region18: #{tpu_custom_call.1} parent=1 // pred_check
      _
    $region19: #{tpu_custom_call.1} parent=1 // pred_check_branch
      %178 = sbr.rel (0) target = $region21
    $region20: #{tpu_custom_call.1} parent=1 // pred_region
      %s180 = ssub.s32 256, 256
      %181 = vsyncadd [#allocation4], %s180
      %s183 = sshll.u32 [#allocation7], 4
      %s184 = int_to_ptr.vmem [resolvable:$true] %s183
      %186 = dma.vmem_to_hbm [thread:$0]  %s184, 256, %s2, [#allocation4]
    $region21: #{tpu_custom_call.1} parent=1 // pred_fallthru
      _
    // Predicated region
    $region22: #{tpu_custom_call.1} parent=1 // pred_check
      _
    $region23: #{tpu_custom_call.1} parent=1 // pred_check_branch
      %188 = sbr.rel (0) target = $region25
    $region24: #{tpu_custom_call.1} parent=1 // pred_region
      %189 = dma.done [#allocation4], 256
    $region25: #{tpu_custom_call.1} parent=1 // pred_fallthru
      _
    %190 = vsyncpa [#allocation3], 1
    %191 = vsyncpa [#allocation6], 1
    %192 = vsyncpa [#allocation4], 1

</llo_original>
